<compile_context>
chip_gen: v7x
topology: tpu7x:2x2x1
jax: 0.10.0
libtpu: 0.0.40
codegen_flags: <defaults>
</compile_context>

<pallas_src>
import functools

import jax
import jax.numpy as jnp
from jax.experimental import pallas as pl
from jax.experimental.pallas import tpu as pltpu


def _round_up(x, m):
    return ((x + m - 1) // m) * m


def _cdiv(a, b):
    return (a + b - 1) // b


def _speech_encoder_kernel(xd_ref, w_ref, b_ref, o_ref, fr_ref, *,
                           n_taps, stride, tile_t):
    # xd_ref: (1, 1, S, n_cols)  phase-deinterleaved, halo'd raw-signal tile
    #                            xd[s, c] = x[(tile_start + c) * S + s]
    # w_ref : (3C, M*S)          packed (short | middle | long) weights, zero padded
    # b_ref : (3C, 1)            packed bias
    # o_ref : (1, 3C, tT)        output tile (PyTorch NCT layout)
    # fr_ref: (M*S, tT) scratch  im2col frame matrix built in-kernel
    #
    # frame[k, j] = x[(tile_start + j)*S + k] = xd[k % S, j + k // S], so rows
    # [d*S, (d+1)*S) of the frame matrix are exactly xd[:, d : d + tT].
    for d in range(n_taps):
        fr_ref[d * stride:(d + 1) * stride, :] = xd_ref[0, 0, :, d:d + tile_t]
    y = jnp.dot(w_ref[...], fr_ref[...], preferred_element_type=jnp.float32)
    y = jnp.maximum(y + b_ref[...], 0.0)
    o_ref[0] = y.astype(o_ref.dtype)


class SpeechEncoderPallas:
    def __init__(self, n_channels, short_kernel, middle_kernel, long_kernel, key):
        assert short_kernel <= long_kernel and middle_kernel <= long_kernel
        self.n_channels = n_channels
        self.short_kernel = short_kernel
        self.middle_kernel = middle_kernel
        self.long_kernel = long_kernel
        self.stride = short_kernel // 2
        assert self.stride >= 1
        C, Ks, Km, Kl, S = n_channels, short_kernel, middle_kernel, long_kernel, self.stride

        self.n_taps = _cdiv(Kl, S)          # M = ceil(Kl / S)
        self.kl_pad = self.n_taps * S       # padded contraction dim (>= Kl)

        ks = jax.random.split(key, 6)

        # PyTorch Conv1d(1, C, K) default init: U(-1/sqrt(K), 1/sqrt(K)).
        def init_w(k, ksize):
            bound = 1.0 / float(ksize) ** 0.5
            return jax.random.uniform(k, (C, ksize), jnp.float32, -bound, bound)

        def init_b(k, ksize):
            bound = 1.0 / float(ksize) ** 0.5
            return jax.random.uniform(k, (C,), jnp.float32, -bound, bound)

        self.w_s = init_w(ks[0], Ks); self.b_s = init_b(ks[1], Ks)
        self.w_m = init_w(ks[2], Km); self.b_m = init_b(ks[3], Km)
        self.w_l = init_w(ks[4], Kl); self.b_l = init_b(ks[5], Kl)

        # Packed weight (3C, Kl_pad): taps beyond each conv's own kernel width
        # (and beyond Kl up to Kl_pad) are exactly zero, so the extra long-frame
        # taps contribute nothing -> one matmul reproduces all three convs.
        w_packed = jnp.zeros((3 * C, self.kl_pad), jnp.float32)
        w_packed = w_packed.at[0:C, :Ks].set(self.w_s)
        w_packed = w_packed.at[C:2 * C, :Km].set(self.w_m)
        w_packed = w_packed.at[2 * C:3 * C, :Kl].set(self.w_l)
        self.w_packed = w_packed
        self.b_packed = jnp.concatenate(
            [self.b_s, self.b_m, self.b_l], axis=0).reshape(3 * C, 1)

    def __call__(self, x, *, time_tile=8192, out_dtype=jnp.float32):
        # x: (B, L) float32 -> (B, 3C, T) out_dtype (PyTorch NCT layout), init_len
        B, init_len = x.shape
        C, S, Ks = self.n_channels, self.stride, self.short_kernel
        M, Kl_pad = self.n_taps, self.kl_pad

        # Stride-alignment padding, exactly as in the PyTorch forward.
        rem = (init_len - Ks) % S
        if rem != 0:
            x = jnp.pad(x, ((0, 0), (0, S - rem)))
        L_pad = x.shape[-1]
        T = (L_pad - Ks) // S + 1

        # Time tile: multiple of 128 (lane-dense stores), large by default to
        # amortize per-grid-step overhead, capped by a VMEM working-set budget
        # (frames scratch + double-buffered in/out blocks).
        tT = max(128, _round_up(min(time_tile, T), 128))
        bytes_per_col = 4 * (Kl_pad + 2 * 3 * C + 2 * S)
        tt_cap = max(128, ((20 * 1024 * 1024 // bytes_per_col) // 128) * 128)
        tT = min(tT, tt_cap)
        n_t = _cdiv(T, tT)
        if B == 1 and n_t == 1 and T > 128:
            # v7x has 2 TensorCores: make sure short single-batch clips still
            # produce >= 2 grid blocks (no-op on single-TC v5e/v6e).
            tT = _round_up(_cdiv(T, 2), 128)
            n_t = _cdiv(T, tT)

        # Phase-deinterleaved, per-tile halo'd raw signal:
        #   x_d[b, t, s, c] = x[b, (t*tT + c)*S + s],  c in [0, n_cols)
        # Built from static strided/reshape ops only (no gather); the halo
        # duplication between tiles is (M-1)/tT of the raw bytes -> negligible.
        n_cols = _round_up(tT + M - 1, 128)
        n_chunks = (n_t - 1) * tT + n_cols
        L_need = n_chunks * S
        x_full = jnp.pad(x, ((0, 0), (0, L_need - L_pad)))
        phases = jnp.swapaxes(x_full.reshape(B, n_chunks, S), 1, 2)  # (B, S, n_chunks)
        x_d = jnp.stack(
            [phases[:, :, t * tT:t * tT + n_cols] for t in range(n_t)],
            axis=1)                                                  # (B, n_t, S, n_cols)

        kernel = functools.partial(
            _speech_encoder_kernel, n_taps=M, stride=S, tile_t=tT)

        grid_spec = pltpu.PrefetchScalarGridSpec(
            num_scalar_prefetch=0,
            grid=(B, n_t),
            in_specs=[
                pl.BlockSpec((1, 1, S, n_cols), lambda b, t: (b, t, 0, 0)),
                pl.BlockSpec((3 * C, Kl_pad), lambda b, t: (0, 0)),
                pl.BlockSpec((3 * C, 1), lambda b, t: (0, 0)),
            ],
            # Output is exactly (B, 3C, T): the single boundary block is a
            # partial (masked) store, all other stores are wide and unmasked,
            # and there is no post-kernel [:, :, :T] slice.
            out_specs=pl.BlockSpec((1, 3 * C, tT), lambda b, t: (b, 0, t)),
            scratch_shapes=[pltpu.VMEM((Kl_pad, tT), jnp.float32)],
        )

        y = pl.pallas_call(
            kernel,
            out_shape=jax.ShapeDtypeStruct((B, 3 * C, T), out_dtype),
            grid_spec=grid_spec,
            compiler_params=pltpu.CompilerParams(
                dimension_semantics=("parallel", "parallel"),
                vmem_limit_bytes=32 * 1024 * 1024),
        )(x_d, self.w_packed, self.b_packed)
        return y, init_len

    def reference(self, x):
        """Pure-JAX reference (three separate convs, original math) for checks."""
        B, init_len = x.shape
        S, Ks, Km, Kl = self.stride, self.short_kernel, self.middle_kernel, self.long_kernel
        rem = (init_len - Ks) % S
        if rem != 0:
            x = jnp.pad(x, ((0, 0), (0, S - rem)))
        L_pad = x.shape[-1]
        T = (L_pad - Ks) // S + 1

        def conv(sig, w, b, K):
            idx = jnp.arange(K)[:, None] + jnp.arange(T)[None, :] * S
            fr = sig[:, idx]                                        # (B, K, T)
            return jnp.maximum(
                jnp.einsum('bkt,ck->bct', fr, w) + b[None, :, None], 0.0)

        x_m = jnp.pad(x, ((0, 0), (0, (T - 1) * S + Km - L_pad)))
        x_l = jnp.pad(x, ((0, 0), (0, (T - 1) * S + Kl - L_pad)))
        ys = conv(x, self.w_s, self.b_s, Ks)
        ym = conv(x_m, self.w_m, self.b_m, Km)
        yl = conv(x_l, self.w_l, self.b_l, Kl)
        return jnp.concatenate([ys, ym, yl], axis=1), init_len


if __name__ == "__main__":
    key = jax.random.PRNGKey(0)
    k_param, k_in, k_param2, k_in2 = jax.random.split(key, 4)

    # Case 1: small clip; exercises the stride-alignment pad path and the
    # single partial (masked) output block (T=33 < tile of 128).
    enc = SpeechEncoderPallas(32, 4, 8, 16, k_param)
    x = jax.random.normal(k_in, (2, 67), dtype=jnp.float32)
    y, init_len = enc(x)
    y = jax.block_until_ready(y)
    y_ref, _ = enc.reference(x)
    assert y.shape == y_ref.shape, (y.shape, y_ref.shape)
    assert init_len == 67
    err = float(jnp.max(jnp.abs(y - y_ref)))
    assert jnp.allclose(y, y_ref, atol=1e-4, rtol=1e-4), err

    # Case 2: multi-tile time grid with cross-tile halos and kernel widths that
    # are NOT multiples of the stride (Kl_pad > Kl path), forced small tile so
    # the halo / partial-last-block machinery is exercised.
    enc2 = SpeechEncoderPallas(16, 5, 11, 21, k_param2)
    x2 = jax.random.normal(k_in2, (2, 603), dtype=jnp.float32)
    y2, init_len2 = enc2(x2, time_tile=128)
    y2 = jax.block_until_ready(y2)
    y2_ref, _ = enc2.reference(x2)
    assert y2.shape == y2_ref.shape, (y2.shape, y2_ref.shape)
    assert init_len2 == 603
    err2 = float(jnp.max(jnp.abs(y2 - y2_ref)))
    assert jnp.allclose(y2, y2_ref, atol=1e-4, rtol=1e-4), err2

    print("KERNEL_OK")
</pallas_src>

<mosaic_0001>
module attributes {stable_mosaic.version = 11 : i64} {
  func.func @_speech_encoder_kernel(%arg0: i32, %arg1: i32, %arg2: memref<1x1x2x256xf32, #tpu.memory_space<vmem>>, %arg3: memref<96x16xf32, #tpu.memory_space<vmem>>, %arg4: memref<96x1xf32, #tpu.memory_space<vmem>>, %arg5: memref<1x96x128xf32, #tpu.memory_space<vmem>>, %arg6: memref<16x128xf32, #tpu.memory_space<vmem>>) attributes {dimension_semantics = [#tpu.dimension_semantics<parallel>, #tpu.dimension_semantics<parallel>], iteration_bounds = array<i64: 2, 1>, scalar_prefetch = 0 : i64, scratch_operands = 1 : i64, tpu.core_type = #tpu.core_type<tc>, window_params = [{transform_indices = @transform_0, window_bounds = array<i64: 1, 1, 2, 256>}, {pipeline_mode = #tpu.pipeline_mode<synchronous>, transform_indices = @transform_1, window_bounds = array<i64: 96, 16>}, {pipeline_mode = #tpu.pipeline_mode<synchronous>, transform_indices = @transform_2, window_bounds = array<i64: 96, 1>}, {transform_indices = @transform_3, window_bounds = array<i64: 1, 96, 128>}]} {
    %c0 = arith.constant 0 : index
    %c0_0 = arith.constant 0 : index
    %c0_1 = arith.constant 0 : index
    %c0_2 = arith.constant 0 : index
    %0 = vector.load %arg2[%c0, %c0_0, %c0_1, %c0_2] : memref<1x1x2x256xf32, #tpu.memory_space<vmem>>, vector<1x1x2x128xf32>
    %1 = vector.shape_cast %0 : vector<1x1x2x128xf32> to vector<2x128xf32>
    %c0_3 = arith.constant 0 : index
    %c0_4 = arith.constant 0 : index
    %2 = vector.load %arg6[%c0_3, %c0_4] : memref<16x128xf32, #tpu.memory_space<vmem>>, vector<2x128xf32>
    tpu.vector_store %arg6[%c0_3, %c0_4], %1 {strides = array<i32>} : memref<16x128xf32, #tpu.memory_space<vmem>>, vector<2x128xf32>,
    %c0_5 = arith.constant 0 : index
    %c0_6 = arith.constant 0 : index
    %c0_7 = arith.constant 0 : index
    %c1 = arith.constant 1 : index
    %3 = vector.load %arg2[%c0_5, %c0_6, %c0_7, %c1] : memref<1x1x2x256xf32, #tpu.memory_space<vmem>>, vector<1x1x2x128xf32>
    %4 = vector.shape_cast %3 : vector<1x1x2x128xf32> to vector<2x128xf32>
    %c2 = arith.constant 2 : index
    %c0_8 = arith.constant 0 : index
    %5 = vector.load %arg6[%c2, %c0_8] : memref<16x128xf32, #tpu.memory_space<vmem>>, vector<2x128xf32>
    tpu.vector_store %arg6[%c2, %c0_8], %4 {strides = array<i32>} : memref<16x128xf32, #tpu.memory_space<vmem>>, vector<2x128xf32>,
    %c0_9 = arith.constant 0 : index
    %c0_10 = arith.constant 0 : index
    %c0_11 = arith.constant 0 : index
    %c2_12 = arith.constant 2 : index
    %6 = vector.load %arg2[%c0_9, %c0_10, %c0_11, %c2_12] : memref<1x1x2x256xf32, #tpu.memory_space<vmem>>, vector<1x1x2x128xf32>
    %7 = vector.shape_cast %6 : vector<1x1x2x128xf32> to vector<2x128xf32>
    %c4 = arith.constant 4 : index
    %c0_13 = arith.constant 0 : index
    %8 = vector.load %arg6[%c4, %c0_13] : memref<16x128xf32, #tpu.memory_space<vmem>>, vector<2x128xf32>
    tpu.vector_store %arg6[%c4, %c0_13], %7 {strides = array<i32>} : memref<16x128xf32, #tpu.memory_space<vmem>>, vector<2x128xf32>,
    %c0_14 = arith.constant 0 : index
    %c0_15 = arith.constant 0 : index
    %c0_16 = arith.constant 0 : index
    %c3 = arith.constant 3 : index
    %9 = vector.load %arg2[%c0_14, %c0_15, %c0_16, %c3] : memref<1x1x2x256xf32, #tpu.memory_space<vmem>>, vector<1x1x2x128xf32>
    %10 = vector.shape_cast %9 : vector<1x1x2x128xf32> to vector<2x128xf32>
    %c6 = arith.constant 6 : index
    %c0_17 = arith.constant 0 : index
    %11 = vector.load %arg6[%c6, %c0_17] : memref<16x128xf32, #tpu.memory_space<vmem>>, vector<2x128xf32>
    tpu.vector_store %arg6[%c6, %c0_17], %10 {strides = array<i32>} : memref<16x128xf32, #tpu.memory_space<vmem>>, vector<2x128xf32>,
    %c0_18 = arith.constant 0 : index
    %c0_19 = arith.constant 0 : index
    %c0_20 = arith.constant 0 : index
    %c4_21 = arith.constant 4 : index
    %12 = vector.load %arg2[%c0_18, %c0_19, %c0_20, %c4_21] : memref<1x1x2x256xf32, #tpu.memory_space<vmem>>, vector<1x1x2x128xf32>
    %13 = vector.shape_cast %12 : vector<1x1x2x128xf32> to vector<2x128xf32>
    %c8 = arith.constant 8 : index
    %c0_22 = arith.constant 0 : index
    %14 = vector.load %arg6[%c8, %c0_22] : memref<16x128xf32, #tpu.memory_space<vmem>>, vector<2x128xf32>
    tpu.vector_store %arg6[%c8, %c0_22], %13 {strides = array<i32>} : memref<16x128xf32, #tpu.memory_space<vmem>>, vector<2x128xf32>,
    %c0_23 = arith.constant 0 : index
    %c0_24 = arith.constant 0 : index
    %c0_25 = arith.constant 0 : index
    %c5 = arith.constant 5 : index
    %15 = vector.load %arg2[%c0_23, %c0_24, %c0_25, %c5] : memref<1x1x2x256xf32, #tpu.memory_space<vmem>>, vector<1x1x2x128xf32>
    %16 = vector.shape_cast %15 : vector<1x1x2x128xf32> to vector<2x128xf32>
    %c10 = arith.constant 10 : index
    %c0_26 = arith.constant 0 : index
    %17 = vector.load %arg6[%c10, %c0_26] : memref<16x128xf32, #tpu.memory_space<vmem>>, vector<2x128xf32>
    tpu.vector_store %arg6[%c10, %c0_26], %16 {strides = array<i32>} : memref<16x128xf32, #tpu.memory_space<vmem>>, vector<2x128xf32>,
    %c0_27 = arith.constant 0 : index
    %c0_28 = arith.constant 0 : index
    %c0_29 = arith.constant 0 : index
    %c6_30 = arith.constant 6 : index
    %18 = vector.load %arg2[%c0_27, %c0_28, %c0_29, %c6_30] : memref<1x1x2x256xf32, #tpu.memory_space<vmem>>, vector<1x1x2x128xf32>
    %19 = vector.shape_cast %18 : vector<1x1x2x128xf32> to vector<2x128xf32>
    %c12 = arith.constant 12 : index
    %c0_31 = arith.constant 0 : index
    %20 = vector.load %arg6[%c12, %c0_31] : memref<16x128xf32, #tpu.memory_space<vmem>>, vector<2x128xf32>
    tpu.vector_store %arg6[%c12, %c0_31], %19 {strides = array<i32>} : memref<16x128xf32, #tpu.memory_space<vmem>>, vector<2x128xf32>,
    %c0_32 = arith.constant 0 : index
    %c0_33 = arith.constant 0 : index
    %c0_34 = arith.constant 0 : index
    %c7 = arith.constant 7 : index
    %21 = vector.load %arg2[%c0_32, %c0_33, %c0_34, %c7] : memref<1x1x2x256xf32, #tpu.memory_space<vmem>>, vector<1x1x2x128xf32>
    %22 = vector.shape_cast %21 : vector<1x1x2x128xf32> to vector<2x128xf32>
    %c14 = arith.constant 14 : index
    %c0_35 = arith.constant 0 : index
    %23 = vector.load %arg6[%c14, %c0_35] : memref<16x128xf32, #tpu.memory_space<vmem>>, vector<2x128xf32>
    tpu.vector_store %arg6[%c14, %c0_35], %22 {strides = array<i32>} : memref<16x128xf32, #tpu.memory_space<vmem>>, vector<2x128xf32>,
    %c0_36 = arith.constant 0 : index
    %c0_37 = arith.constant 0 : index
    %24 = vector.load %arg3[%c0_36, %c0_37] : memref<96x16xf32, #tpu.memory_space<vmem>>, vector<96x16xf32>
    %c0_38 = arith.constant 0 : index
    %c0_39 = arith.constant 0 : index
    %25 = vector.load %arg6[%c0_38, %c0_39] : memref<16x128xf32, #tpu.memory_space<vmem>>, vector<16x128xf32>
    %cst = arith.constant dense<0.000000e+00> : vector<96x128xf32>
    %26 = tpu.matmul %24, %25, %cst {dimension_numbers = #tpu.dot_dimension_numbers<[1], [0], [0], [1], [0, 0, 1, 1], [], []>} : vector<96x16xf32>, vector<16x128xf32>, vector<96x128xf32> -> vector<96x128xf32>
    %c0_40 = arith.constant 0 : index
    %c0_41 = arith.constant 0 : index
    %27 = vector.load %arg4[%c0_40, %c0_41] : memref<96x1xf32, #tpu.memory_space<vmem>>, vector<96x1xf32>
    %28 = vector.broadcast %27 : vector<96x1xf32> to vector<96x128xf32>
    %29 = arith.addf %26, %28 : vector<96x128xf32>
    %cst_42 = arith.constant 0.000000e+00 : f32
    %30 = vector.broadcast %cst_42 : f32 to vector<96x128xf32>
    %31 = arith.maximumf %29, %30 : vector<96x128xf32>
    %c0_43 = arith.constant 0 : index
    %c0_44 = arith.constant 0 : index
    %c0_45 = arith.constant 0 : index
    %32 = vector.load %arg5[%c0_43, %c0_44, %c0_45] : memref<1x96x128xf32, #tpu.memory_space<vmem>>, vector<1x96x128xf32>
    %33 = vector.shape_cast %32 : vector<1x96x128xf32> to vector<96x128xf32>
    %34 = vector.shape_cast %31 : vector<96x128xf32> to vector<1x96x128xf32>
    tpu.vector_store %arg5[%c0_43, %c0_44, %c0_45], %34 {strides = array<i32>} : memref<1x96x128xf32, #tpu.memory_space<vmem>>, vector<1x96x128xf32>,
    return
  }
  func.func @transform_0(%arg0: i32, %arg1: i32) -> (i32, i32, i32, i32) {
    %c0_i32 = arith.constant 0 : i32
    %c0_i32_0 = arith.constant 0 : i32
    %c0_i32_1 = arith.constant 0 : i32
    return %arg0, %arg1, %c0_i32, %c0_i32_0 : i32, i32, i32, i32
  }
  func.func @transform_1(%arg0: i32, %arg1: i32) -> (i32, i32) {
    %c0_i32 = arith.constant 0 : i32
    %c0_i32_0 = arith.constant 0 : i32
    %c0_i32_1 = arith.constant 0 : i32
    return %c0_i32, %c0_i32_0 : i32, i32
  }
  func.func @transform_2(%arg0: i32, %arg1: i32) -> (i32, i32) {
    %c0_i32 = arith.constant 0 : i32
    %c0_i32_0 = arith.constant 0 : i32
    %c0_i32_1 = arith.constant 0 : i32
    return %c0_i32, %c0_i32_0 : i32, i32
  }
  func.func @transform_3(%arg0: i32, %arg1: i32) -> (i32, i32, i32) {
    %c0_i32 = arith.constant 0 : i32
    %c0_i32_0 = arith.constant 0 : i32
    return %arg0, %c0_i32, %arg1 : i32, i32, i32
  }
}

</mosaic_0001>

<llo_original>
// kernel: tpu_custom_call.1
$region0: #{tpu_custom_call.1}
  #allocation0 [shape = 'u32[]', space=smem, size = 0x4, offset = 0x4, fixed_abs, tag = 'smem constant byte address 0x4 - core index']
  #allocation1 [shape = 'u32[144,128]{1,0:T(1,128)}', space=vmem, size = 0x12000, scoped, tag = 'internal scratch']
  #allocation2 [shape = 'f32[16,128]{1,0:T(8,128)}', space=vmem, size = 0x2000, scoped, tag = 'scratch operand']
  %s0 = inlined_call_operand.vmem [shape: f32[2,1,2,256], index: 0, kind: input, shape index: {}]
  %s1 = inlined_call_operand.vmem [shape: f32[96,16], index: 1, kind: input, shape index: {}]
  %s2 = inlined_call_operand.vmem [shape: f32[96,1], index: 2, kind: input, shape index: {}]
  %s3 = inlined_call_operand.vmem [shape: f32[2,96,33], index: 3, kind: output, shape index: {}]
  %s4 = sld [smem:[#allocation0]]
  $region45: #{tpu_custom_call.1} parent=0
    _
  %s6 = ssub.s32 1, %s4
  %s7 = scalar_select 0, %s6, %s4
  loop: start=0, step=1, limit=4
  $region2: #{tpu_custom_call.1} parent=0 // loop_pre_header
    _
  $region3: #{tpu_custom_call.1} parent=0 // loop_header
    %s9 = sphi 0, %s13
    %p10 = scmp.ge.s32.totalorder %s9, 4
    %s16 = sphi 0, %s28
    %s17 = sphi 0, %s24
    %s18 = sphi 0, %s16
    %s19 = sphi 0, %s17
    %s20 = sphi 0, %s18
    %s21 = sphi 0, %s19
    %s33 = sphi 0, %s35
    %s36 = sphi 0, %s33
    %s37 = sphi 0, %s36
    %s53 = sphi 0, %s37
    %s57 = sphi 0, %s57
    %s59 = sphi 0, %s57
    %s60 = sphi 0, %s59
    %s74 = sphi 0, %s60
    %s78 = sphi 0, %s78
    %s80 = sphi 0, %s78
    %s81 = sphi 0, %s80
    %s95 = sphi 0, %s81
    %s103 = sphi 0, %s105
    %s106 = sphi 0, %s103
    %s107 = sphi 0, %s106
    %s123 = sphi 0, %s107
  $region4: #{tpu_custom_call.1} parent=0 // loop_header_branch
    %12 = sbr.rel (%p10) target = $region8
  $region5: #{tpu_custom_call.1} parent=0 // loop_body
    %s14 = ssub.s32 %s9, 1
    %s15 = ssub.s32 %s9, 2
    %s22 = sadd.s32 1, %s17
    %p23 = scmp.ge.s32.totalorder %s22, 1
    %s24 = scalar_select %p23, 0, %s22
    %s25 = sadd.s32 1, %s16
    %s26 = scalar_select %p23, %s25, %s16
    %p27 = scmp.ge.s32.totalorder %s26, 2
    %s28 = scalar_select %p27, 0, %s26
    %s29 = ssub.s32 %s16, %s28
    %s30 = ssub.s32 %s17, %s24
    %s31 = sor.u32 %s29, %s30
    %p32 = scmp.eq.s32.totalorder %s31, 0
    %s34 = sadd.s32 %s33, 1
    %s35 = scalar_select %p32, %s33, %s34
    %p38 = pneg %p32
    %p39 = scmp.eq.s32.totalorder %s9, 1
    %p40 = por %p38, %p39
    %p41 = scmp.ne.s32.totalorder %s33, %s36
    %p42 = scmp.eq.s32.totalorder %s9, 0
    %p43 = por %p41, %p42
    %p44 = scmp.ne.s32.totalorder %s33, %s36
    %p45 = scmp.eq.s32.totalorder %s14, 1
    %p46 = por %p44, %p45
    %p47 = scmp.ne.s32.totalorder %s36, %s37
    %p48 = scmp.eq.s32.totalorder %s14, 0
    %p49 = por %p47, %p48
    %p50 = scmp.ne.s32.totalorder %s36, %s37
    %p51 = scmp.eq.s32.totalorder %s15, 1
    %p52 = por %p50, %p51
    %p54 = scmp.ne.s32.totalorder %s37, %s53
    %p55 = scmp.eq.s32.totalorder %s15, 0
    %p56 = por %p54, %p55
    %s58 = sadd.s32 %s57, 1
    %p61 = scmp.eq.s32.totalorder %s9, 1
    %p62 = scmp.ne.s32.totalorder %s57, %s59
    %p63 = scmp.eq.s32.totalorder %s9, 0
    %p64 = por %p62, %p63
    %p65 = scmp.ne.s32.totalorder %s57, %s59
    %p66 = scmp.eq.s32.totalorder %s14, 1
    %p67 = por %p65, %p66
    %p68 = scmp.ne.s32.totalorder %s59, %s60
    %p69 = scmp.eq.s32.totalorder %s14, 0
    %p70 = por %p68, %p69
    %p71 = scmp.ne.s32.totalorder %s59, %s60
    %p72 = scmp.eq.s32.totalorder %s15, 1
    %p73 = por %p71, %p72
    %p75 = scmp.ne.s32.totalorder %s60, %s74
    %p76 = scmp.eq.s32.totalorder %s15, 0
    %p77 = por %p75, %p76
    %s79 = sadd.s32 %s78, 1
    %p82 = scmp.eq.s32.totalorder %s9, 1
    %p83 = scmp.ne.s32.totalorder %s78, %s80
    %p84 = scmp.eq.s32.totalorder %s9, 0
    %p85 = por %p83, %p84
    %p86 = scmp.ne.s32.totalorder %s78, %s80
    %p87 = scmp.eq.s32.totalorder %s14, 1
    %p88 = por %p86, %p87
    %p89 = scmp.ne.s32.totalorder %s80, %s81
    %p90 = scmp.eq.s32.totalorder %s14, 0
    %p91 = por %p89, %p90
    %p92 = scmp.ne.s32.totalorder %s80, %s81
    %p93 = scmp.eq.s32.totalorder %s15, 1
    %p94 = por %p92, %p93
    %p96 = scmp.ne.s32.totalorder %s81, %s95
    %p97 = scmp.eq.s32.totalorder %s15, 0
    %p98 = por %p96, %p97
    %s99 = ssub.s32 %s16, %s28
    %s100 = ssub.s32 %s17, %s24
    %s101 = sor.u32 %s99, %s100
    %p102 = scmp.eq.s32.totalorder %s101, 0
    %s104 = sadd.s32 %s103, 1
    %s105 = scalar_select %p102, %s103, %s104
    %p108 = pneg %p102
    %p109 = scmp.eq.s32.totalorder %s9, 1
    %p110 = por %p108, %p109
    %p111 = scmp.ne.s32.totalorder %s103, %s106
    %p112 = scmp.eq.s32.totalorder %s9, 0
    %p113 = por %p111, %p112
    %p114 = scmp.ne.s32.totalorder %s103, %s106
    %p115 = scmp.eq.s32.totalorder %s14, 1
    %p116 = por %p114, %p115
    %p117 = scmp.ne.s32.totalorder %s106, %s107
    %p118 = scmp.eq.s32.totalorder %s14, 0
    %p119 = por %p117, %p118
    %p120 = scmp.ne.s32.totalorder %s106, %s107
    %p121 = scmp.eq.s32.totalorder %s15, 1
    %p122 = por %p120, %p121
    %p124 = scmp.ne.s32.totalorder %s107, %s123
    %p125 = scmp.eq.s32.totalorder %s15, 0
    %p126 = por %p124, %p125
    %p127 = scmp.le.s32.totalorder 1, %s9
    %p128 = scmp.lt.s32.totalorder %s9, 3
    %p129 = pnand %p127, %p128
    %p130 = pneg %p129
    // Predicated region
    $region9: #{tpu_custom_call.1} parent=5 // pred_check
      _
    $region10: #{tpu_custom_call.1} parent=5 // pred_check_branch
      %132 = sbr.rel (%p129) target = $region12
    $region11: #{tpu_custom_call.1} parent=5 // pred_region
      %s133 = ssub.s32 %s9, 1
      // Predicated region
      $region13: #{tpu_custom_call.1} parent=11 // pred_check
        %p134 = pneg %p70
      $region14: #{tpu_custom_call.1} parent=11 // pred_check_branch
        %136 = sbr.rel (%p134) target = $region16
      $region15: #{tpu_custom_call.1} parent=11 // pred_region
        _
      $region16: #{tpu_custom_call.1} parent=11 // pred_fallthru
        _
      // Predicated region
      $region17: #{tpu_custom_call.1} parent=11 // pred_check
        %p137 = pneg %p91
      $region18: #{tpu_custom_call.1} parent=11 // pred_check_branch
        %139 = sbr.rel (%p137) target = $region20
      $region19: #{tpu_custom_call.1} parent=11 // pred_region
        _
      $region20: #{tpu_custom_call.1} parent=11 // pred_fallthru
        _
    $region12: #{tpu_custom_call.1} parent=5 // pred_fallthru
      _
    %p140 = scmp.lt.s32.totalorder %s9, 2
    // Predicated region
    $region21: #{tpu_custom_call.1} parent=5 // pred_check
      %p141 = pneg %p140
    $region22: #{tpu_custom_call.1} parent=5 // pred_check_branch
      %143 = sbr.rel (%p141) target = $region24
    $region23: #{tpu_custom_call.1} parent=5 // pred_region
      // Predicated region
      $region25: #{tpu_custom_call.1} parent=23 // pred_check
        %p144 = pneg %p43
      $region26: #{tpu_custom_call.1} parent=23 // pred_check_branch
        %146 = sbr.rel (%p144) target = $region28
      $region27: #{tpu_custom_call.1} parent=23 // pred_region
        %p147 = scmp.lt.s32.totalorder %s16, 1
        %s148 = scalar_select %p147, %s16, 1
        %p149 = scmp.lt.s32.totalorder %s17, 0
        %s150 = scalar_select %p149, %s17, 0
        %s151 = smul.addr %s150, 2
        %s152 = smul.addr %s148, 2
        %s153 = sadd.s32 %s151, %s152
        %s154 = smul.addr %s153, 2
        %s155 = scalar_lea.vmem %s0, %s154
      $region28: #{tpu_custom_call.1} parent=23 // pred_fallthru
        _
    $region24: #{tpu_custom_call.1} parent=5 // pred_fallthru
      _
    %p156 = scmp.le.s32.totalorder 1, %s9
    %p157 = scmp.lt.s32.totalorder %s9, 3
    %p158 = pnand %p156, %p157
    %p159 = pneg %p158
    // Predicated region
    $region29: #{tpu_custom_call.1} parent=5 // pred_check
      _
    $region30: #{tpu_custom_call.1} parent=5 // pred_check_branch
      %161 = sbr.rel (%p158) target = $region32
    $region31: #{tpu_custom_call.1} parent=5 // pred_region
      %s162 = ssub.s32 %s9, 1
      %p163 = scmp.lt.s32.totalorder %s18, 1
      %s164 = scalar_select %p163, %s18, 1
      %p165 = scmp.lt.s32.totalorder %s19, 0
      %s166 = scalar_select %p165, %s19, 0
      %s167 = smul.addr %s166, 2
      %s168 = smul.addr %s164, 2
      %s169 = sadd.s32 %s167, %s168
      %s170 = smul.addr %s169, 2
      %s171 = scalar_lea.vmem %s0, %s170
      %p172 = pneg %p49
      %p173 = pneg %p46
      %p174 = pneg %p70
      %p175 = pneg %p67
      %p176 = pneg %p91
      %p177 = pneg %p88
      %p178 = pneg %p119
      %p179 = pneg %p116
      %p180 = scmp.lt.s32.totalorder %s18, 1
      %s181 = scalar_select %p180, %s18, 1
      %p182 = scmp.lt.s32.totalorder %s19, 0
      %s183 = scalar_select %p182, %s19, 0
      %s184 = smul.addr %s181, 12
      %s185 = sadd.s32 %s183, %s184
      %s186 = smul.addr %s185, 8
      %s187 = scalar_lea.vmem %s3, %s186
      %p188 = scmp.lt.s32.totalorder %s18, 1
      %s189 = scalar_select %p188, %s18, 1
      %p190 = scmp.lt.s32.totalorder %s19, 0
      %s191 = scalar_select %p190, %s19, 0
      %s192 = smul.addr %s191, 2
      %s193 = smul.addr %s189, 2
      %s194 = sadd.s32 %s192, %s193
      %s195 = smul.addr %s194, 2
      %s196 = scalar_lea.vmem %s0, %s195
      %p197 = scmp.lt.s32.totalorder %s18, 1
      %s198 = scalar_select %p197, %s18, 1
      %p199 = scmp.lt.s32.totalorder %s19, 0
      %s200 = scalar_select %p199, %s19, 0
      %s201 = smul.addr %s198, 12
      %s202 = sadd.s32 %s200, %s201
      %s203 = smul.addr %s202, 8
      %s204 = scalar_lea.vmem %s3, %s203
      %v205 = vld [vmem:[%s196] sm:$0x3]
      %206 = vst [vmem:[#allocation2] sm:$0x3] %v205
      %v207 = vld [vmem:[%s196] sm:$0xf]
      %v210 = vunpack.c.l.s4 1983009808
      %v211 = vunpack.c.0.s8 %v210
      %v212 = vlaneseq
      %v213 = vshrl.u32 %v212, 7
      %v214 = vsub.s32 %v211, %v213
      %v215 = vrot.slane %v207, %v214
      %v216 = vcombine.high %v215, %v215
      %217 = vrot.lane.b32.xlu0 %v215, 127
      %v218 = vpop.permute.xlu0 %217
      %219 = vrot.lane.b32.xlu0 %v216, 127
      %v220 = vpop.permute.xlu0 %219
      %vm221 = vcmask 1039360
      %v222 = vsel %vm221, %v218, %v220
      %224 = vst [vmem:[#allocation2 + $0x2] sm:$0x3] %v222
      %v225 = vld [vmem:[%s196] sm:$0xf]
      %v228 = vunpack.c.l.s4 1983009808
      %v229 = vunpack.c.0.s8 %v228
      %v230 = vlaneseq
      %v231 = vshrl.u32 %v230, 7
      %v232 = vsub.s32 %v229, %v231
      %v233 = vrot.slane %v225, %v232
      %v234 = vcombine.high %v233, %v233
      %235 = vrot.lane.b32.xlu0 %v233, 126
      %v236 = vpop.permute.xlu0 %235
      %237 = vrot.lane.b32.xlu0 %v234, 126
      %v238 = vpop.permute.xlu0 %237
      %vm239 = vcmask 1031168
      %v240 = vsel %vm239, %v236, %v238
      %242 = vst [vmem:[#allocation2 + $0x4] sm:$0x3] %v240
      %v243 = vld [vmem:[%s196] sm:$0xf]
      %v246 = vunpack.c.l.s4 1983009808
      %v247 = vunpack.c.0.s8 %v246
      %v248 = vlaneseq
      %v249 = vshrl.u32 %v248, 7
      %v250 = vsub.s32 %v247, %v249
      %v251 = vrot.slane %v243, %v250
      %v252 = vcombine.high %v251, %v251
      %253 = vrot.lane.b32.xlu0 %v251, 125
      %v254 = vpop.permute.xlu0 %253
      %255 = vrot.lane.b32.xlu0 %v252, 125
      %v256 = vpop.permute.xlu0 %255
      %vm257 = vcmask 1022976
      %v258 = vsel %vm257, %v254, %v256
      %260 = vst [vmem:[#allocation2 + $0x6] sm:$0x3] %v258
      %v261 = vld [vmem:[%s196] sm:$0xf]
      %v264 = vunpack.c.l.s4 1983009808
      %v265 = vunpack.c.0.s8 %v264
      %v266 = vlaneseq
      %v267 = vshrl.u32 %v266, 7
      %v268 = vsub.s32 %v265, %v267
      %v269 = vrot.slane %v261, %v268
      %v270 = vcombine.high %v269, %v269
      %271 = vrot.lane.b32.xlu0 %v269, 124
      %v272 = vpop.permute.xlu0 %271
      %273 = vrot.lane.b32.xlu0 %v270, 124
      %v274 = vpop.permute.xlu0 %273
      %vm275 = vcmask 1014784
      %v276 = vsel %vm275, %v272, %v274
      %278 = vst [vmem:[#allocation2 + $0x8] sm:$0x3] %v276
      %v279 = vld [vmem:[%s196] sm:$0xf]
      %v282 = vunpack.c.l.s4 1983009808
      %v283 = vunpack.c.0.s8 %v282
      %v284 = vlaneseq
      %v285 = vshrl.u32 %v284, 7
      %v286 = vsub.s32 %v283, %v285
      %v287 = vrot.slane %v279, %v286
      %v288 = vcombine.high %v287, %v287
      %289 = vrot.lane.b32.xlu0 %v287, 123
      %v290 = vpop.permute.xlu0 %289
      %291 = vrot.lane.b32.xlu0 %v288, 123
      %v292 = vpop.permute.xlu0 %291
      %vm293 = vcmask 1006592
      %v294 = vsel %vm293, %v290, %v292
      %296 = vst [vmem:[#allocation2 + $0xa] sm:$0x3] %v294
      %v297 = vld [vmem:[%s196] sm:$0xf]
      %v300 = vunpack.c.l.s4 1983009808
      %v301 = vunpack.c.0.s8 %v300
      %v302 = vlaneseq
      %v303 = vshrl.u32 %v302, 7
      %v304 = vsub.s32 %v301, %v303
      %v305 = vrot.slane %v297, %v304
      %v306 = vcombine.high %v305, %v305
      %307 = vrot.lane.b32.xlu0 %v305, 122
      %v308 = vpop.permute.xlu0 %307
      %309 = vrot.lane.b32.xlu0 %v306, 122
      %v310 = vpop.permute.xlu0 %309
      %vm311 = vcmask 998400
      %v312 = vsel %vm311, %v308, %v310
      %314 = vst [vmem:[#allocation2 + $0xc] sm:$0x3] %v312
      %v315 = vld [vmem:[%s196] sm:$0xf]
      %v318 = vunpack.c.l.s4 1983009808
      %v319 = vunpack.c.0.s8 %v318
      %v320 = vlaneseq
      %v321 = vshrl.u32 %v320, 7
      %v322 = vsub.s32 %v319, %v321
      %v323 = vrot.slane %v315, %v322
      %v324 = vcombine.high %v323, %v323
      %325 = vrot.lane.b32.xlu0 %v323, 121
      %v326 = vpop.permute.xlu0 %325
      %327 = vrot.lane.b32.xlu0 %v324, 121
      %v328 = vpop.permute.xlu0 %327
      %vm329 = vcmask 990208
      %v330 = vsel %vm329, %v326, %v328
      %332 = vst [vmem:[#allocation2 + $0xe] sm:$0x3] %v330
      %v333 = vld [vmem:[%s1] sm:$0xff]
      %v334 = vld [vmem:[%s1 + $0x8] sm:$0xff]
      %v335 = vld [vmem:[%s1 + $0x10] sm:$0xff]
      %v336 = vld [vmem:[%s1 + $0x18] sm:$0xff]
      %v337 = vld [vmem:[%s1 + $0x20] sm:$0xff]
      %v338 = vld [vmem:[%s1 + $0x28] sm:$0xff]
      %v339 = vld [vmem:[%s1 + $0x30] sm:$0xff]
      %v340 = vld [vmem:[%s1 + $0x38] sm:$0xff]
      %v341 = vld [vmem:[%s1 + $0x40] sm:$0xff]
      %v342 = vld [vmem:[%s1 + $0x48] sm:$0xff]
      %v343 = vld [vmem:[%s1 + $0x50] sm:$0xff]
      %v344 = vld [vmem:[%s1 + $0x58] sm:$0xff]
      %v345 = vld [vmem:[#allocation2] sm:$0xff]
      %v346 = vld [vmem:[#allocation2 + $0x8] sm:$0xff]
      %v347 = vld [vmem:[%s2] sm:$0xff]
      %v348 = vld [vmem:[%s2 + $0x8] sm:$0xff]
      %v349 = vld [vmem:[%s2 + $0x10] sm:$0xff]
      %v350 = vld [vmem:[%s2 + $0x18] sm:$0xff]
      %v351 = vld [vmem:[%s2 + $0x20] sm:$0xff]
      %v352 = vld [vmem:[%s2 + $0x28] sm:$0xff]
      %v353 = vld [vmem:[%s2 + $0x30] sm:$0xff]
      %v354 = vld [vmem:[%s2 + $0x38] sm:$0xff]
      %v355 = vld [vmem:[%s2 + $0x40] sm:$0xff]
      %v356 = vld [vmem:[%s2 + $0x48] sm:$0xff]
      %v357 = vld [vmem:[%s2 + $0x50] sm:$0xff]
      %v358 = vld [vmem:[%s2 + $0x58] sm:$0xff]
      %360 = vset.pattern.permute.xlu0 0
      %361 = vperm.xlu0 %360, %v347
      %v362 = vpop.permute.xlu0 %361
      %365 = vset.pattern.permute.xlu0 0
      %366 = vperm.xlu0 %365, %v348
      %v367 = vpop.permute.xlu0 %366
      %370 = vset.pattern.permute.xlu0 0
      %371 = vperm.xlu0 %370, %v349
      %v372 = vpop.permute.xlu0 %371
      %375 = vset.pattern.permute.xlu0 0
      %376 = vperm.xlu0 %375, %v350
      %v377 = vpop.permute.xlu0 %376
      %380 = vset.pattern.permute.xlu0 0
      %381 = vperm.xlu0 %380, %v351
      %v382 = vpop.permute.xlu0 %381
      %385 = vset.pattern.permute.xlu0 0
      %386 = vperm.xlu0 %385, %v352
      %v387 = vpop.permute.xlu0 %386
      %390 = vset.pattern.permute.xlu0 0
      %391 = vperm.xlu0 %390, %v353
      %v392 = vpop.permute.xlu0 %391
      %395 = vset.pattern.permute.xlu0 0
      %396 = vperm.xlu0 %395, %v354
      %v397 = vpop.permute.xlu0 %396
      %400 = vset.pattern.permute.xlu0 0
      %401 = vperm.xlu0 %400, %v355
      %v402 = vpop.permute.xlu0 %401
      %405 = vset.pattern.permute.xlu0 0
      %406 = vperm.xlu0 %405, %v356
      %v407 = vpop.permute.xlu0 %406
      %410 = vset.pattern.permute.xlu0 0
      %411 = vperm.xlu0 %410, %v357
      %v412 = vpop.permute.xlu0 %411
      %415 = vset.pattern.permute.xlu0 0
      %416 = vperm.xlu0 %415, %v358
      %v417 = vpop.permute.xlu0 %416
      %vm419 = vcmask 130048
      %v421 = vsel %vm419, %v333, 0
      %v424 = vsel %vm419, %v334, 0
      %v427 = vsel %vm419, %v335, 0
      %v430 = vsel %vm419, %v336, 0
      %v433 = vsel %vm419, %v337, 0
      %v436 = vsel %vm419, %v338, 0
      %v439 = vsel %vm419, %v339, 0
      %v442 = vsel %vm419, %v340, 0
      %v445 = vsel %vm419, %v341, 0
      %v448 = vsel %vm419, %v342, 0
      %v451 = vsel %vm419, %v343, 0
      %v454 = vsel %vm419, %v344, 0
      %456 = vmatprep.subr.mxu0 0.0
      %457 = vmatpush1.msra.mxu0 %v345
      %458 = vmatprep.subr.mxu0 0.0
      %459 = vmatpush1.msra.mxu0 %v346
      %460 = vmatprep.subr.mxu0 0.0
      %461 = vmatpush1.msra.mxu0 0.0
      %462 = vmatprep.subr.mxu0 0.0
      %463 = vmatpush1.msra.mxu0 0.0
      %464 = vmatprep.subr.mxu0 0.0
      %465 = vmatpush1.msra.mxu0 0.0
      %466 = vmatprep.subr.mxu0 0.0
      %467 = vmatpush1.msra.mxu0 0.0
      %468 = vmatprep.subr.mxu0 0.0
      %469 = vmatpush1.msra.mxu0 0.0
      %470 = vmatprep.subr.mxu0 0.0
      %471 = vmatpush1.msra.mxu0 0.0
      %472 = vmatprep.subr.mxu0 0.0
      %473 = vmatpush1.msra.mxu0 0.0
      %474 = vmatprep.subr.mxu0 0.0
      %475 = vmatpush1.msra.mxu0 0.0
      %476 = vmatprep.subr.mxu0 0.0
      %477 = vmatpush1.msra.mxu0 0.0
      %478 = vmatprep.subr.mxu0 0.0
      %479 = vmatpush1.msra.mxu0 0.0
      %480 = vmatprep.subr.mxu0 0.0
      %481 = vmatpush1.msra.mxu0 0.0
      %482 = vmatprep.subr.mxu0 0.0
      %483 = vmatpush1.msra.mxu0 0.0
      %484 = vmatprep.subr.mxu0 0.0
      %485 = vmatpush1.msra.mxu0 0.0
      %486 = vmatprep.subr.mxu0 0.0
      %487 = vmatpush1.msra.mxu0 0.0
      %488 = vmatprep.subr.mxu0 0.0
      %489 = vmatpush1.msra.mxu0 0.0
      %490 = vmatprep.subr.mxu0 0.0
      %491 = vmatpush1.msra.mxu0 0.0
      %492 = vmatprep.subr.mxu0 0.0
      %493 = vmatpush1.msra.mxu0 0.0
      %494 = vmatprep.subr.mxu0 0.0
      %495 = vmatpush1.msra.mxu0 0.0
      %496 = vmatprep.subr.mxu0 0.0
      %497 = vmatpush1.msra.mxu0 0.0
      %498 = vmatprep.subr.mxu0 0.0
      %499 = vmatpush1.msra.mxu0 0.0
      %500 = vmatprep.subr.mxu0 0.0
      %501 = vmatpush1.msra.mxu0 0.0
      %502 = vmatprep.subr.mxu0 0.0
      %503 = vmatpush1.msra.mxu0 0.0
      %504 = vmatprep.subr.mxu0 0.0
      %505 = vmatpush1.msra.mxu0 0.0
      %506 = vmatprep.subr.mxu0 0.0
      %507 = vmatpush1.msra.mxu0 0.0
      %508 = vmatprep.subr.mxu0 0.0
      %509 = vmatpush1.msra.mxu0 0.0
      %510 = vmatprep.subr.mxu0 0.0
      %511 = vmatpush1.msra.mxu0 0.0
      %512 = vmatprep.subr.mxu0 0.0
      %513 = vmatpush1.msra.mxu0 0.0
      %514 = vmatprep.subr.mxu0 0.0
      %515 = vmatpush1.msra.mxu0 0.0
      %516 = vmatprep.subr.mxu0 0.0
      %517 = vmatpush1.msra.mxu0 0.0
      %518 = vmatprep.subr.mxu0 0.0
      %519 = vmatpush1.msra.mxu0 0.0
      %520 = vmatprep.mubr.f32.mxu0 0.0
      %521 = vmatmul.mubr.f32.gmra.mrb[0].mxu0 %v421
      %v522 = vpop.f32.mrb[0].mxu0
      %v523 = vadd.f32 %v362, %v522
      %v524 = vpop.f32.mrb[0].mxu0
      %525 = vmatprep.mubr.f32.mxu0 0.0
      %526 = vmatmul.mubr.f32.gmra.mrb[0].mxu0 %v424
      %v527 = vpop.f32.mrb[0].mxu0
      %v528 = vadd.f32 %v367, %v527
      %v529 = vpop.f32.mrb[0].mxu0
      %530 = vmatprep.mubr.f32.mxu0 0.0
      %531 = vmatmul.mubr.f32.gmra.mrb[0].mxu0 %v427
      %v532 = vpop.f32.mrb[0].mxu0
      %v533 = vadd.f32 %v372, %v532
      %v534 = vpop.f32.mrb[0].mxu0
      %535 = vmatprep.mubr.f32.mxu0 0.0
      %536 = vmatmul.mubr.f32.gmra.mrb[0].mxu0 %v430
      %v537 = vpop.f32.mrb[0].mxu0
      %v538 = vadd.f32 %v377, %v537
      %v539 = vpop.f32.mrb[0].mxu0
      %540 = vmatprep.mubr.f32.mxu0 0.0
      %541 = vmatmul.mubr.f32.gmra.mrb[0].mxu0 %v433
      %v542 = vpop.f32.mrb[0].mxu0
      %v543 = vadd.f32 %v382, %v542
      %v544 = vpop.f32.mrb[0].mxu0
      %545 = vmatprep.mubr.f32.mxu0 0.0
      %546 = vmatmul.mubr.f32.gmra.mrb[0].mxu0 %v436
      %v547 = vpop.f32.mrb[0].mxu0
      %v548 = vadd.f32 %v387, %v547
      %v549 = vpop.f32.mrb[0].mxu0
      %550 = vmatprep.mubr.f32.mxu0 0.0
      %551 = vmatmul.mubr.f32.gmra.mrb[0].mxu0 %v439
      %v552 = vpop.f32.mrb[0].mxu0
      %v553 = vadd.f32 %v392, %v552
      %v554 = vpop.f32.mrb[0].mxu0
      %555 = vmatprep.mubr.f32.mxu0 0.0
      %556 = vmatmul.mubr.f32.gmra.mrb[0].mxu0 %v442
      %v557 = vpop.f32.mrb[0].mxu0
      %v558 = vadd.f32 %v397, %v557
      %v559 = vpop.f32.mrb[0].mxu0
      %560 = vmatprep.mubr.f32.mxu0 0.0
      %561 = vmatmul.mubr.f32.gmra.mrb[0].mxu0 %v445
      %v562 = vpop.f32.mrb[0].mxu0
      %v563 = vadd.f32 %v402, %v562
      %v564 = vpop.f32.mrb[0].mxu0
      %565 = vmatprep.mubr.f32.mxu0 0.0
      %566 = vmatmul.mubr.f32.gmra.mrb[0].mxu0 %v448
      %v567 = vpop.f32.mrb[0].mxu0
      %v568 = vadd.f32 %v407, %v567
      %v569 = vpop.f32.mrb[0].mxu0
      %570 = vmatprep.mubr.f32.mxu0 0.0
      %571 = vmatmul.mubr.f32.gmra.mrb[0].mxu0 %v451
      %v572 = vpop.f32.mrb[0].mxu0
      %v573 = vadd.f32 %v412, %v572
      %v574 = vpop.f32.mrb[0].mxu0
      %575 = vmatprep.mubr.f32.mxu0 0.0
      %576 = vmatmul.mubr.f32.gmra.mrb[0].mxu0 %v454
      %v577 = vpop.f32.mrb[0].mxu0
      %v578 = vadd.f32 %v417, %v577
      %v579 = vpop.f32.mrb[0].mxu0
      %580 = vdwg.mxu0
      %v581 = vmax.f32 %v523, 0.0
      %v582 = vmax.f32 %v528, 0.0
      %v583 = vmax.f32 %v533, 0.0
      %v584 = vmax.f32 %v538, 0.0
      %v585 = vmax.f32 %v543, 0.0
      %v586 = vmax.f32 %v548, 0.0
      %v587 = vmax.f32 %v553, 0.0
      %v588 = vmax.f32 %v558, 0.0
      %v589 = vmax.f32 %v563, 0.0
      %v590 = vmax.f32 %v568, 0.0
      %v591 = vmax.f32 %v573, 0.0
      %v592 = vmax.f32 %v578, 0.0
      %593 = vst [vmem:[%s204] sm:$0xff] %v581
      %594 = vst [vmem:[%s204 + $0x8] sm:$0xff] %v582
      %595 = vst [vmem:[%s204 + $0x10] sm:$0xff] %v583
      %596 = vst [vmem:[%s204 + $0x18] sm:$0xff] %v584
      %597 = vst [vmem:[%s204 + $0x20] sm:$0xff] %v585
      %598 = vst [vmem:[%s204 + $0x28] sm:$0xff] %v586
      %599 = vst [vmem:[%s204 + $0x30] sm:$0xff] %v587
      %600 = vst [vmem:[%s204 + $0x38] sm:$0xff] %v588
      %601 = vst [vmem:[%s204 + $0x40] sm:$0xff] %v589
      %602 = vst [vmem:[%s204 + $0x48] sm:$0xff] %v590
      %603 = vst [vmem:[%s204 + $0x50] sm:$0xff] %v591
      %604 = vst [vmem:[%s204 + $0x58] sm:$0xff] %v592
      %p605 = scmp.lt.s32.totalorder %s18, 1
      %s606 = scalar_select %p605, %s18, 1
      %p607 = scmp.lt.s32.totalorder %s19, 0
      %s608 = scalar_select %p607, %s19, 0
      %s609 = smul.addr %s606, 12
      %s610 = sadd.s32 %s608, %s609
      %s611 = smul.addr %s610, 8
      %s612 = scalar_lea.vmem %s3, %s611
      // Predicated region
      $region33: #{tpu_custom_call.1} parent=31 // pred_check
        %p613 = pneg %p116
      $region34: #{tpu_custom_call.1} parent=31 // pred_check_branch
        %615 = sbr.rel (%p613) target = $region36
      $region35: #{tpu_custom_call.1} parent=31 // pred_region
        _
      $region36: #{tpu_custom_call.1} parent=31 // pred_fallthru
        _
    $region32: #{tpu_custom_call.1} parent=5 // pred_fallthru
      _
    %p616 = scmp.le.s32.totalorder 2, %s9
    // Predicated region
    $region37: #{tpu_custom_call.1} parent=5 // pred_check
      %p617 = pneg %p616
    $region38: #{tpu_custom_call.1} parent=5 // pred_check_branch
      %619 = sbr.rel (%p617) target = $region40
    $region39: #{tpu_custom_call.1} parent=5 // pred_region
      %s620 = ssub.s32 %s9, 2
      // Predicated region
      $region41: #{tpu_custom_call.1} parent=39 // pred_check
        %p621 = pneg %p122
      $region42: #{tpu_custom_call.1} parent=39 // pred_check_branch
        %623 = sbr.rel (%p621) target = $region44
      $region43: #{tpu_custom_call.1} parent=39 // pred_region
        %p624 = scmp.lt.s32.totalorder %s20, 1
        %s625 = scalar_select %p624, %s20, 1
        %p626 = scmp.lt.s32.totalorder %s21, 0
        %s627 = scalar_select %p626, %s21, 0
        %s628 = smul.addr %s625, 12
        %s629 = sadd.s32 %s627, %s628
        %s630 = smul.addr %s629, 8
        %s631 = scalar_lea.vmem %s3, %s630
      $region44: #{tpu_custom_call.1} parent=39 // pred_fallthru
        _
    $region40: #{tpu_custom_call.1} parent=5 // pred_fallthru
      _
  $region6: #{tpu_custom_call.1} parent=0 // loop_footer
    %s13 = sadd.s32 1, %s9
  $region7: #{tpu_custom_call.1} parent=0 // loop_footer_branch
    %8 = sbr.rel target = $region3
  $region8: #{tpu_custom_call.1} parent=0 // loop_exit
    _

</llo_original>
